<compile_context>
chip_gen: v6e
topology: v6e:2x2x1
jax: 0.10.0
libtpu: 0.0.40
codegen_flags: <defaults>
</compile_context>

<pallas_src>
from collections import namedtuple
from functools import partial

import numpy as np
import jax
import jax.numpy as jnp
from jax.experimental import pallas as pl
from jax.experimental.pallas import tpu as pltpu

NEG_LARGE = -10000          # T5 masking constant for the int32 mask dtype path
_LANE = 128
_SUBLANE = 8
_VMEM_LIMIT = 32 * 1024 * 1024       # explicit scoped-VMEM limit, safe on v5e/v6e/v7x
_TARGET_BLOCK_BYTES = 4 << 20        # ~4 MiB output block -> 8 MiB double-buffered
_MAX_S_TILE = 512

InputData = namedtuple(
    "InputData",
    [
        "input_ids", "labels", "attention_mask", "encoder_hidden_states",
        "encoder_attention_mask", "inputs_embeds", "head_mask",
        "cross_attn_head_mask", "past_key_values", "use_cache",
        "output_attentions", "output_hidden_states", "return_dict",
        "hidden_states", "encoder_extended_attention_mask", "position_bias",
        "encoder_decoder_position_bias", "decoder_input_ids",
        "decoder_inputs_embeds", "lm_logits", "loss",
        "extended_attention_mask", "decoder_attention_mask",
        "decoder_head_mask", "input_shape",
    ],
)


class T5Config:
    def __init__(self, is_decoder=True, use_cache=True, output_attentions=False,
                 output_hidden_states=False, use_return_dict=True):
        self.is_decoder = is_decoder
        self.use_cache = use_cache
        self.output_attentions = output_attentions
        self.output_hidden_states = output_hidden_states
        self.use_return_dict = use_return_dict


def _round_up(x, m):
    return ((x + m - 1) // m) * m


# ----------------------------- Pallas kernels ------------------------------

def _decoder_extended_mask_kernel(attn_ref, out_ref, *, prefix, s_axis):
    """Causal ∧ padding-mask additive bias {0, -10000} for one (batch-row, S-tile).

    attn_ref: (1, 1, mask_pad) int32 -- one batch row, resident across S tiles
    out_ref : (1, 1, TILE_S, mask_pad) int32
    prefix  : static int = mask_S - seq_length (past key positions, always visible)
    s_axis  : static int, grid axis carrying the S-tile index

    VALU-minimal: (cols < prefix) is subsumed by (cols - rows) <= row0 + prefix
    for rows >= 0, the per-row padding bias is computed once on the (1, mask_pad)
    row, and the body is a single iota-difference compare + one select.
    """
    tile_s, mask_pad = out_ref.shape[-2], out_ref.shape[-1]
    row0 = pl.program_id(s_axis) * tile_s
    rows = jax.lax.broadcasted_iota(jnp.int32, (tile_s, mask_pad), 0)
    cols = jax.lax.broadcasted_iota(jnp.int32, (tile_s, mask_pad), 1)
    keep_causal = (cols - rows) <= (row0 + prefix)
    attn_row = attn_ref[0, :, :]                                     # (1, mask_pad)
    bias_row = jnp.where(attn_row != 0, jnp.int32(0), jnp.int32(NEG_LARGE))
    out_ref[0, 0, :, :] = jnp.where(keep_causal, bias_row, jnp.int32(NEG_LARGE))


def _decoder_causal_bias_kernel(out_ref, *, prefix):
    """All-ones fast path: pure causal bias, no input DMA, batch collapsed.

    out_ref: (1, 1, TILE_S, mask_pad) int32
    """
    tile_s, mask_pad = out_ref.shape[-2], out_ref.shape[-1]
    row0 = pl.program_id(0) * tile_s
    rows = jax.lax.broadcasted_iota(jnp.int32, (tile_s, mask_pad), 0)
    cols = jax.lax.broadcasted_iota(jnp.int32, (tile_s, mask_pad), 1)
    keep = (cols - rows) <= (row0 + prefix)
    out_ref[0, 0, :, :] = jnp.where(keep, jnp.int32(0), jnp.int32(NEG_LARGE))


def _broadcast_invert_mask_kernel(mask_ref, out_ref):
    """(1 - mask) * -10000 on a lane-dense (rows, L_pad) slab."""
    out_ref[...] = jnp.where(mask_ref[...] != 0, jnp.int32(0), jnp.int32(NEG_LARGE))


# ------------------------------ wrappers ------------------------------------

def _choose_s_tile(seq_length, mask_pad):
    """Largest multiple-of-8 S tile with <= ~4 MiB output block, capped at 512.

    4 MiB block (8 MiB double-buffered) stays well inside the 32 MiB scoped
    VMEM we request explicitly (fits v5e's 16 MiB default would not, hence the
    explicit limit) and amortizes the ~0.35 us per-grid-step overhead.
    """
    s_pad8 = _round_up(seq_length, _SUBLANE)
    by_bytes = max(_SUBLANE,
                   (_TARGET_BLOCK_BYTES // (mask_pad * 4)) // _SUBLANE * _SUBLANE)
    return min(_MAX_S_TILE, by_bytes, s_pad8)


def decoder_extended_attention_mask(attention_mask, seq_length):
    """(B, 1, S, mask_S) int32 additive bias from a user-provided 2-D mask."""
    b, mask_s = attention_mask.shape
    prefix = mask_s - seq_length  # past_key_values length (0 with no cache)

    # Lane-dense output: pad the key dim to a multiple of 128 so stores are
    # unmasked full-width vst (the single biggest lever for a writeback-bound
    # kernel); slice back only if padding was actually added.
    mask_pad = _round_up(mask_s, _LANE)
    tile_s = _choose_s_tile(seq_length, mask_pad)
    s_pad = _round_up(seq_length, tile_s)
    n_s = s_pad // tile_s

    # (B, 1, mask_pad): the per-batch-row block (1, 1, mask_pad) is a clean
    # full-extent block on the last two dims; padded key columns are 0 so they
    # simply become -10000 and are sliced off.
    attn3 = attention_mask.astype(jnp.int32).reshape(b, 1, mask_s)
    if mask_pad != mask_s:
        attn3 = jnp.pad(attn3, ((0, 0), (0, 0), (0, mask_pad - mask_s)))

    if b == 1:
        # Single batch row: put the S-tile axis on the grid so megacore
        # sharding splits the real work instead of a size-1 batch axis.
        grid = (n_s,)
        in_specs = [pl.BlockSpec((1, 1, mask_pad), lambda s: (0, 0, 0))]
        out_specs = pl.BlockSpec((1, 1, tile_s, mask_pad), lambda s: (0, 0, s, 0))
        s_axis = 0
    else:
        # Batch leading: the (1, 1, mask_pad) input row stays resident across
        # the inner S-tile loop (no re-DMA per step).
        grid = (b, n_s)
        in_specs = [pl.BlockSpec((1, 1, mask_pad), lambda i, s: (i, 0, 0))]
        out_specs = pl.BlockSpec((1, 1, tile_s, mask_pad),
                                 lambda i, s: (i, 0, s, 0))
        s_axis = 1

    # TODO(synk): emit bf16/int16 instead of int32 if the downstream attention
    # consumer tolerates it (halves/quarters HBM writeback); kept int32 to
    # match the reference int32 mask-dtype semantics exactly.
    out = pl.pallas_call(
        partial(_decoder_extended_mask_kernel, prefix=prefix, s_axis=s_axis),
        out_shape=jax.ShapeDtypeStruct((b, 1, s_pad, mask_pad), jnp.int32),
        grid=grid,
        in_specs=in_specs,
        out_specs=out_specs,
        compiler_params=pltpu.CompilerParams(
            dimension_semantics=("parallel",) * len(grid),
            vmem_limit_bytes=_VMEM_LIMIT),
    )(attn3)

    if s_pad != seq_length or mask_pad != mask_s:
        out = out[:, :, :seq_length, :mask_s]
    return out


def decoder_extended_attention_mask_all_ones(batch_size, seq_length, mask_s):
    """All-ones attention-mask fast path: pure causal bias.

    Every batch row is identical, so compute one (1, 1, S, mask_S) slab with no
    input DMA at all and broadcast it over the batch axis in the wrapper.
    """
    prefix = mask_s - seq_length
    mask_pad = _round_up(mask_s, _LANE)
    tile_s = _choose_s_tile(seq_length, mask_pad)
    s_pad = _round_up(seq_length, tile_s)
    n_s = s_pad // tile_s

    core = pl.pallas_call(
        partial(_decoder_causal_bias_kernel, prefix=prefix),
        out_shape=jax.ShapeDtypeStruct((1, 1, s_pad, mask_pad), jnp.int32),
        grid=(n_s,),
        out_specs=pl.BlockSpec((1, 1, tile_s, mask_pad), lambda s: (0, 0, s, 0)),
        compiler_params=pltpu.CompilerParams(
            dimension_semantics=("parallel",),
            vmem_limit_bytes=_VMEM_LIMIT),
    )()
    if s_pad != seq_length or mask_pad != mask_s:
        core = core[:, :, :seq_length, :mask_s]
    return jnp.broadcast_to(core, (batch_size, 1, seq_length, mask_s))


def broadcast_inverted_mask(mask):
    """(B, 1, 1, L) int32 additive bias = (1 - mask) * -10000.

    Lane-padded to a multiple of 128 and batch-chunked so large masks pipeline
    (respecting the v7x scoped-VMEM default) while small masks run as a single
    full-array block.
    """
    b, length = mask.shape
    l_pad = _round_up(length, _LANE)
    m = mask.astype(jnp.int32)
    if l_pad != length:
        m = jnp.pad(m, ((0, 0), (0, l_pad - length)))

    row_bytes = l_pad * 4
    target_rows = max(_SUBLANE,
                      (_TARGET_BLOCK_BYTES // row_bytes) // _SUBLANE * _SUBLANE)
    if b <= target_rows or b % _SUBLANE != 0:
        tb = b                      # full-extent batch block (always legal)
    else:
        tb = min(target_rows, b)
        while b % tb != 0:          # terminates: b % 8 == 0 here
            tb -= _SUBLANE
    grid_b = b // tb

    out = pl.pallas_call(
        _broadcast_invert_mask_kernel,
        out_shape=jax.ShapeDtypeStruct((b, l_pad), jnp.int32),
        grid=(grid_b,),
        in_specs=[pl.BlockSpec((tb, l_pad), lambda i: (i, 0))],
        out_specs=pl.BlockSpec((tb, l_pad), lambda i: (i, 0)),
        compiler_params=pltpu.CompilerParams(
            dimension_semantics=("parallel",),
            vmem_limit_bytes=_VMEM_LIMIT),
    )(m)
    if l_pad != length:
        out = out[:, :length]
    return out.reshape(b, 1, 1, length)   # free layout reshape in XLA


# -------------------------- forward-pass plumbing --------------------------

def _empty_i32():
    return jnp.zeros((0,), jnp.int32)


def t5_before_embedding_pipeline(config, inputs: InputData) -> InputData:
    # Flag defaulting (mirrors the torch .numel() checks; host-side Python).
    use_cache = (inputs.use_cache if inputs.use_cache.size != 0
                 else jnp.array([int(config.use_cache)], jnp.int32))
    output_attentions = (inputs.output_attentions if inputs.output_attentions.size != 0
                         else jnp.array([int(config.output_attentions)], jnp.int32))
    output_hidden_states = (inputs.output_hidden_states if inputs.output_hidden_states.size != 0
                            else jnp.array([int(config.output_hidden_states)], jnp.int32))
    return_dict = (inputs.return_dict if inputs.return_dict.size != 0
                   else jnp.array([int(config.use_return_dict)], jnp.int32))

    if inputs.input_ids.size != 0 and inputs.inputs_embeds.size != 0:
        raise ValueError("You cannot specify both input_ids and inputs_embeds")
    elif inputs.input_ids.size != 0:
        input_shape = inputs.input_ids.shape
        input_ids = inputs.input_ids.reshape(-1, input_shape[-1])
        input_shape = input_ids.shape
    elif inputs.inputs_embeds.size != 0:
        input_shape = inputs.inputs_embeds.shape[:-1]
        input_ids = inputs.input_ids
    else:
        raise ValueError("You have to specify either input_ids or inputs_embeds")

    batch_size, seq_length = input_shape
    if inputs.past_key_values.size != 0:
        # past_key_values laid out as (layers, 2, B, H, past_len, d); [0][0].shape[2] == past_len
        mask_seq_length = inputs.past_key_values.shape[-2] + seq_length
    else:
        mask_seq_length = seq_length

    if int(use_cache[0]) == 1:
        assert config.is_decoder, "`use_cache` can only be True for a decoder"

    attn_provided = inputs.attention_mask.size != 0
    attention_mask = (inputs.attention_mask if attn_provided
                      else jnp.ones((batch_size, mask_seq_length), jnp.int32))

    encoder_attention_mask = inputs.encoder_attention_mask
    if (config.is_decoder and encoder_attention_mask.size == 0
            and inputs.encoder_hidden_states.size != 0):
        encoder_seq_length = inputs.encoder_hidden_states.shape[1]
        encoder_attention_mask = jnp.ones((batch_size, encoder_seq_length), jnp.int32)

    # ---- extended attention mask (Pallas hot path) ----
    if attention_mask.ndim == 2:
        if config.is_decoder:
            if attn_provided:
                extended_attention_mask = decoder_extended_attention_mask(
                    attention_mask, seq_length)
            else:
                # Synthesized all-ones mask: skip input DMA and the per-vreg
                # padding select, and collapse the batch axis entirely.
                extended_attention_mask = decoder_extended_attention_mask_all_ones(
                    batch_size, seq_length, mask_seq_length)
        else:
            extended_attention_mask = broadcast_inverted_mask(attention_mask)
    else:
        # TODO(synk): 3-D attention_mask branch not exercised; kept in plain JAX.
        extended_attention_mask = ((1 - attention_mask[:, None, :, :])
                                   * NEG_LARGE).astype(jnp.int32)

    # ---- inverted encoder mask (Pallas hot path; int32 dtype branch) ----
    if config.is_decoder and inputs.encoder_hidden_states.size != 0:
        encoder_extended_attention_mask = broadcast_inverted_mask(encoder_attention_mask)
    else:
        encoder_extended_attention_mask = _empty_i32()

    return inputs._replace(
        input_ids=input_ids,
        attention_mask=attention_mask,
        encoder_attention_mask=encoder_attention_mask,
        use_cache=use_cache,
        output_attentions=output_attentions,
        output_hidden_states=output_hidden_states,
        return_dict=return_dict,
        extended_attention_mask=extended_attention_mask,
        encoder_extended_attention_mask=encoder_extended_attention_mask,
        position_bias=_empty_i32(),
        encoder_decoder_position_bias=_empty_i32(),
        input_shape=jnp.array(input_shape, jnp.int32),
    )


# ----------------------------------- main -----------------------------------

if __name__ == "__main__":
    B, S, ENC_S, D = 2, 8, 8, 32
    key = jax.random.PRNGKey(0)
    k_ids, k_attn, k_enc_attn, k_enc_h = jax.random.split(key, 4)

    input_ids = jax.random.randint(k_ids, (B, S), 0, 100, dtype=jnp.int32)
    attention_mask = jax.random.bernoulli(k_attn, 0.8, (B, S)).astype(jnp.int32)
    encoder_attention_mask = jax.random.bernoulli(k_enc_attn, 0.8, (B, ENC_S)).astype(jnp.int32)
    encoder_hidden_states = jax.random.normal(k_enc_h, (B, ENC_S, D), jnp.float32)

    empty = _empty_i32()
    base_inputs = InputData(
        input_ids=input_ids, labels=empty, attention_mask=attention_mask,
        encoder_hidden_states=encoder_hidden_states,
        encoder_attention_mask=encoder_attention_mask,
        inputs_embeds=jnp.zeros((0,), jnp.float32), head_mask=empty,
        cross_attn_head_mask=empty, past_key_values=empty, use_cache=empty,
        output_attentions=empty, output_hidden_states=empty, return_dict=empty,
        hidden_states=empty, encoder_extended_attention_mask=empty,
        position_bias=empty, encoder_decoder_position_bias=empty,
        decoder_input_ids=empty, decoder_inputs_embeds=empty, lm_logits=empty,
        loss=empty, extended_attention_mask=empty, decoder_attention_mask=empty,
        decoder_head_mask=empty, input_shape=empty,
    )

    config = T5Config(is_decoder=True, use_cache=True)

    # ---- case 1: user-provided attention mask ----
    out = t5_before_embedding_pipeline(config, base_inputs)
    jax.block_until_ready(out.extended_attention_mask)
    jax.block_until_ready(out.encoder_extended_attention_mask)

    attn_np = np.asarray(attention_mask)
    causal = (np.arange(S)[None, :] <= np.arange(S)[:, None]).astype(np.int32)
    ref_ext = (1 - causal[None, None, :, :] * attn_np[:, None, None, :]) * NEG_LARGE
    enc_np = np.asarray(encoder_attention_mask)
    ref_enc = (1 - enc_np[:, None, None, :]) * NEG_LARGE

    assert out.extended_attention_mask.shape == (B, 1, S, S)
    assert out.encoder_extended_attention_mask.shape == (B, 1, 1, ENC_S)
    np.testing.assert_array_equal(np.asarray(out.extended_attention_mask), ref_ext)
    np.testing.assert_array_equal(np.asarray(out.encoder_extended_attention_mask), ref_enc)

    # ---- case 2: synthesized all-ones attention mask (fast path) ----
    inputs_all_ones = base_inputs._replace(attention_mask=empty)
    out2 = t5_before_embedding_pipeline(config, inputs_all_ones)
    jax.block_until_ready(out2.extended_attention_mask)

    ref_ext_ones = np.broadcast_to((1 - causal[None, None, :, :]) * NEG_LARGE,
                                   (B, 1, S, S))
    assert out2.extended_attention_mask.shape == (B, 1, S, S)
    assert out2.attention_mask.shape == (B, S)
    np.testing.assert_array_equal(np.asarray(out2.attention_mask), np.ones((B, S), np.int32))
    np.testing.assert_array_equal(np.asarray(out2.extended_attention_mask), ref_ext_ones)

    print("KERNEL_OK")
</pallas_src>

<mosaic_0001>
module attributes {stable_mosaic.version = 11 : i64} {
  func.func @_decoder_extended_mask_kernel(%arg0: i32, %arg1: i32, %arg2: memref<1x1x128xi32, #tpu.memory_space<vmem>>, %arg3: memref<1x1x8x128xi32, #tpu.memory_space<vmem>>) attributes {dimension_semantics = [#tpu.dimension_semantics<parallel>, #tpu.dimension_semantics<parallel>], iteration_bounds = array<i64: 2, 1>, scalar_prefetch = 0 : i64, scratch_operands = 0 : i64, tpu.core_type = #tpu.core_type<tc>, window_params = [{transform_indices = @transform_0, window_bounds = array<i64: 1, 1, 128>}, {transform_indices = @transform_1, window_bounds = array<i64: 1, 1, 8, 128>}]} {
    %c8_i32 = arith.constant 8 : i32
    %0 = arith.muli %arg1, %c8_i32 : i32
    %1 = tpu.iota {dimensions = array<i32: 0>} : vector<8x128xi32>
    %2 = tpu.iota {dimensions = array<i32: 1>} : vector<8x128xi32>
    %3 = arith.subi %2, %1 : vector<8x128xi32>
    %c0_i32 = arith.constant 0 : i32
    %4 = arith.addi %0, %c0_i32 : i32
    %5 = vector.broadcast %4 : i32 to vector<8x128xi32>
    %6 = arith.cmpi sle, %3, %5 : vector<8x128xi32>
    %c0 = arith.constant 0 : index
    %c0_0 = arith.constant 0 : index
    %c0_1 = arith.constant 0 : index
    %7 = vector.load %arg2[%c0, %c0_0, %c0_1] : memref<1x1x128xi32, #tpu.memory_space<vmem>>, vector<1x1x128xi32>
    %8 = vector.shape_cast %7 : vector<1x1x128xi32> to vector<1x128xi32>
    %c0_i32_2 = arith.constant 0 : i32
    %9 = vector.broadcast %c0_i32_2 : i32 to vector<1x128xi32>
    %10 = arith.cmpi ne, %8, %9 : vector<1x128xi32>
    %c0_i32_3 = arith.constant 0 : i32
    %c-10000_i32 = arith.constant -10000 : i32
    %11 = vector.broadcast %c0_i32_3 : i32 to vector<1x128xi32>
    %12 = vector.broadcast %c-10000_i32 : i32 to vector<1x128xi32>
    %13 = arith.select %10, %11, %12 : vector<1x128xi1>, vector<1x128xi32>
    %c-10000_i32_4 = arith.constant -10000 : i32
    %14 = vector.shape_cast %13 : vector<1x128xi32> to vector<1x128xi32>
    %15 = vector.broadcast %14 : vector<1x128xi32> to vector<8x128xi32>
    %16 = vector.broadcast %c-10000_i32_4 : i32 to vector<8x128xi32>
    %17 = arith.select %6, %15, %16 : vector<8x128xi1>, vector<8x128xi32>
    %c0_5 = arith.constant 0 : index
    %c0_6 = arith.constant 0 : index
    %c0_7 = arith.constant 0 : index
    %c0_8 = arith.constant 0 : index
    %18 = vector.load %arg3[%c0_5, %c0_6, %c0_7, %c0_8] : memref<1x1x8x128xi32, #tpu.memory_space<vmem>>, vector<1x1x8x128xi32>
    %19 = vector.shape_cast %18 : vector<1x1x8x128xi32> to vector<8x128xi32>
    %20 = vector.shape_cast %17 : vector<8x128xi32> to vector<1x1x8x128xi32>
    tpu.vector_store %arg3[%c0_5, %c0_6, %c0_7, %c0_8], %20 {strides = array<i32>} : memref<1x1x8x128xi32, #tpu.memory_space<vmem>>, vector<1x1x8x128xi32>,
    return
  }
  func.func @transform_0(%arg0: i32, %arg1: i32) -> (i32, i32, i32) {
    %c0_i32 = arith.constant 0 : i32
    %c0_i32_0 = arith.constant 0 : i32
    %c0_i32_1 = arith.constant 0 : i32
    return %arg0, %c0_i32, %c0_i32_0 : i32, i32, i32
  }
  func.func @transform_1(%arg0: i32, %arg1: i32) -> (i32, i32, i32, i32) {
    %c0_i32 = arith.constant 0 : i32
    %c0_i32_0 = arith.constant 0 : i32
    %c0_i32_1 = arith.constant 0 : i32
    return %arg0, %c0_i32, %arg1, %c0_i32_0 : i32, i32, i32, i32
  }
}

</mosaic_0001>

<llo_original>
// kernel: tpu_custom_call.1
$region0: #{tpu_custom_call.1}
  #allocation0 [shape = 'u32[]', space=smem, size = 0x4, offset = 0x4, fixed_abs, tag = 'smem constant byte address 0x4 - core index']
  #allocation1 [shape = 'u32[144,128]{1,0:T(1,128)}', space=vmem, size = 0x12000, scoped, tag = 'internal scratch']
  %s0 = inlined_call_operand.hbm [shape: s32[2,1,128], index: 0, kind: input, shape index: {}]
  %s1 = inlined_call_operand.hbm [shape: s32[2,1,8,128], index: 1, kind: output, shape index: {}]
  %s2 = sld [smem:[#allocation0]]
  $region41: #{tpu_custom_call.1} parent=0
    _
  %s4 = ssub.s32 1, %s2
  %s5 = scalar_select 0, %s4, %s2
  $region1: #{tpu_custom_call.1} parent=0
    #allocation2 [shape = 'u8[1024]{0}', space=vmem, size = 0x400, scoped, tag = 'input window, operand 0']
    #allocation3 [shape = 's32[2]{0}', space=sflag, size = 0x8, scoped, tag = 'scoped memory for tpu_custom_call.1']
    #allocation4 [shape = 's32[2]{0}', space=sflag, size = 0x8, scoped, tag = 'scoped memory for tpu_custom_call.1']
    #allocation5 [shape = 'u8[8192]{0}', space=vmem, size = 0x2000, scoped, tag = 'output window, operand 0']
    %6 = vsyncpa [#allocation3], 0
    %s7 = scalar_lea.sflag [#allocation3], 1
    %8 = vsyncpa %s7, 0
    %9 = vsyncpa [#allocation4], 0
    %s10 = scalar_lea.sflag [#allocation4], 1
    %11 = vsyncpa %s10, 0
    loop: start=0, step=1, limit=4
    $region2: #{tpu_custom_call.1} parent=1 // loop_pre_header
      _
    $region3: #{tpu_custom_call.1} parent=1 // loop_header
      %s13 = sphi 0, %s17
      %p14 = scmp.ge.s32.totalorder %s13, 4
      %s20 = sphi 0, %s32
      %s21 = sphi 0, %s28
      %s22 = sphi 0, %s20
      %s23 = sphi 0, %s21
      %s24 = sphi 0, %s22
      %s25 = sphi 0, %s23
      %s35 = sphi 0, %s37
      %s38 = sphi 0, %s35
      %s39 = sphi 0, %s38
      %s55 = sphi 0, %s39
      %s63 = sphi 0, %s65
      %s66 = sphi 0, %s63
      %s67 = sphi 0, %s66
      %s83 = sphi 0, %s67
    $region4: #{tpu_custom_call.1} parent=1 // loop_header_branch
      %16 = sbr.rel (%p14) target = $region8
    $region5: #{tpu_custom_call.1} parent=1 // loop_body
      %s18 = ssub.s32 %s13, 1
      %s19 = ssub.s32 %s13, 2
      %s26 = sadd.s32 1, %s21
      %p27 = scmp.ge.s32.totalorder %s26, 1
      %s28 = scalar_select %p27, 0, %s26
      %s29 = sadd.s32 1, %s20
      %s30 = scalar_select %p27, %s29, %s20
      %p31 = scmp.ge.s32.totalorder %s30, 2
      %s32 = scalar_select %p31, 0, %s30
      %s33 = ssub.s32 %s20, %s32
      %p34 = scmp.eq.s32.totalorder %s33, 0
      %s36 = sadd.s32 %s35, 1
      %s37 = scalar_select %p34, %s35, %s36
      %p40 = pneg %p34
      %p41 = scmp.eq.s32.totalorder %s13, 1
      %p42 = por %p40, %p41
      %p43 = scmp.ne.s32.totalorder %s35, %s38
      %p44 = scmp.eq.s32.totalorder %s13, 0
      %p45 = por %p43, %p44
      %p46 = scmp.ne.s32.totalorder %s35, %s38
      %p47 = scmp.eq.s32.totalorder %s18, 1
      %p48 = por %p46, %p47
      %p49 = scmp.ne.s32.totalorder %s38, %s39
      %p50 = scmp.eq.s32.totalorder %s18, 0
      %p51 = por %p49, %p50
      %p52 = scmp.ne.s32.totalorder %s38, %s39
      %p53 = scmp.eq.s32.totalorder %s19, 1
      %p54 = por %p52, %p53
      %p56 = scmp.ne.s32.totalorder %s39, %s55
      %p57 = scmp.eq.s32.totalorder %s19, 0
      %p58 = por %p56, %p57
      %s59 = ssub.s32 %s20, %s32
      %s60 = ssub.s32 %s21, %s28
      %s61 = sor.u32 %s59, %s60
      %p62 = scmp.eq.s32.totalorder %s61, 0
      %s64 = sadd.s32 %s63, 1
      %s65 = scalar_select %p62, %s63, %s64
      %p68 = pneg %p62
      %p69 = scmp.eq.s32.totalorder %s13, 1
      %p70 = por %p68, %p69
      %p71 = scmp.ne.s32.totalorder %s63, %s66
      %p72 = scmp.eq.s32.totalorder %s13, 0
      %p73 = por %p71, %p72
      %p74 = scmp.ne.s32.totalorder %s63, %s66
      %p75 = scmp.eq.s32.totalorder %s18, 1
      %p76 = por %p74, %p75
      %p77 = scmp.ne.s32.totalorder %s66, %s67
      %p78 = scmp.eq.s32.totalorder %s18, 0
      %p79 = por %p77, %p78
      %p80 = scmp.ne.s32.totalorder %s66, %s67
      %p81 = scmp.eq.s32.totalorder %s19, 1
      %p82 = por %p80, %p81
      %p84 = scmp.ne.s32.totalorder %s67, %s83
      %p85 = scmp.eq.s32.totalorder %s19, 0
      %p86 = por %p84, %p85
      %p87 = scmp.le.s32.totalorder 1, %s13
      %p88 = scmp.lt.s32.totalorder %s13, 3
      %p89 = pnand %p87, %p88
      %p90 = pneg %p89
      // Predicated region
      $region9: #{tpu_custom_call.1} parent=5 // pred_check
        _
      $region10: #{tpu_custom_call.1} parent=5 // pred_check_branch
        %92 = sbr.rel (%p89) target = $region12
      $region11: #{tpu_custom_call.1} parent=5 // pred_region
        %s93 = ssub.s32 %s13, 1
      $region12: #{tpu_custom_call.1} parent=5 // pred_fallthru
        _
      %p94 = scmp.lt.s32.totalorder %s13, 2
      // Predicated region
      $region13: #{tpu_custom_call.1} parent=5 // pred_check
        %p95 = pneg %p94
      $region14: #{tpu_custom_call.1} parent=5 // pred_check_branch
        %97 = sbr.rel (%p95) target = $region16
      $region15: #{tpu_custom_call.1} parent=5 // pred_region
        // Predicated region
        $region17: #{tpu_custom_call.1} parent=15 // pred_check
          %p98 = pneg %p45
        $region18: #{tpu_custom_call.1} parent=15 // pred_check_branch
          %100 = sbr.rel (%p98) target = $region20
        $region19: #{tpu_custom_call.1} parent=15 // pred_region
          %s101 = sand.u32 %s35, 1
          %s102 = scalar_lea.sflag [#allocation3], %s101
          %s103 = sand.u32 %s35, 1
          %s104 = scalar_lea.vmem [#allocation2], %s103
          %s106 = ssub.s32 16, 16
          %107 = vsyncadd %s102, %s106
          %s108 = smul.addr %s20, 16
          %s109 = scalar_lea.hbm %s0, %s108
          %s111 = sshll.u32 %s104, 4
          %s112 = int_to_ptr.vmem [resolvable:$true] %s111
          %114 = dma.hbm_to_vmem [thread:$0]  %s109, 16, %s112, %s102
        $region20: #{tpu_custom_call.1} parent=15 // pred_fallthru
          _
      $region16: #{tpu_custom_call.1} parent=5 // pred_fallthru
        _
      %p115 = scmp.le.s32.totalorder 1, %s13
      %p116 = scmp.lt.s32.totalorder %s13, 3
      %p117 = pnand %p115, %p116
      %p118 = pneg %p117
      // Predicated region
      $region21: #{tpu_custom_call.1} parent=5 // pred_check
        _
      $region22: #{tpu_custom_call.1} parent=5 // pred_check_branch
        %120 = sbr.rel (%p117) target = $region24
      $region23: #{tpu_custom_call.1} parent=5 // pred_region
        %s121 = ssub.s32 %s13, 1
        %s122 = sand.u32 %s38, 1
        %s123 = scalar_lea.sflag [#allocation3], %s122
        %s124 = sand.u32 %s38, 1
        %s125 = scalar_lea.vmem [#allocation2], %s124
        // Predicated region
        $region25: #{tpu_custom_call.1} parent=23 // pred_check
          %p126 = pneg %p51
        $region26: #{tpu_custom_call.1} parent=23 // pred_check_branch
          %128 = sbr.rel (%p126) target = $region28
        $region27: #{tpu_custom_call.1} parent=23 // pred_region
          %129 = dma.done %s123, 16
        $region28: #{tpu_custom_call.1} parent=23 // pred_fallthru
          _
        %s130 = sand.u32 %s38, 1
        %s131 = scalar_lea.sflag [#allocation3], %s130
        %s132 = sand.u32 %s38, 1
        %s133 = scalar_lea.vmem [#allocation2], %s132
        %p134 = pneg %p51
        %p135 = pneg %p48
        %p136 = pneg %p79
        %p137 = pneg %p76
        %s138 = sand.u32 %s66, 1
        %s139 = scalar_lea.sflag [#allocation4], %s138
        %s140 = sand.u32 %s66, 1
        %s141 = smul.addr %s140, 8
        %s142 = scalar_lea.vmem [#allocation5], %s141
        %s143 = smul.u32 %s23, 8
        %v144 = vlaneseq
        %v145 = vshrl.u32 %v144, 7
        %v146 = vlaneseq
        %v147 = vand.u32 %v146, 127
        %v148 = vsub.s32 %v147, %v145
        %v149 = vstv %s143
        %vm150 = vcmp.le.s32.totalorder %v148, %v149
        %v151 = vld [vmem:[%s125] sm:$0x1]
        %vm152 = vcmp.ne.s32.totalorder %v151, 0
        %v153 = vsel %vm152, 0, 4294957296
        %v154 = vlaneseq
        %v155 = vshrl.u32 %v154, 7
        %v156 = vsub.s32 0, %v155
        %v157 = vrot.slane %v153, %v156
        %v158 = vsel %vm150, %v157, 4294957296
        %159 = vst [vmem:[%s142] sm:$0xff] %v158
        %s160 = sand.u32 %s66, 1
        %s161 = scalar_lea.sflag [#allocation4], %s160
        %s162 = sand.u32 %s66, 1
        %s163 = smul.addr %s162, 8
        %s164 = scalar_lea.vmem [#allocation5], %s163
        // Predicated region
        $region29: #{tpu_custom_call.1} parent=23 // pred_check
          %p165 = pneg %p76
        $region30: #{tpu_custom_call.1} parent=23 // pred_check_branch
          %167 = sbr.rel (%p165) target = $region32
        $region31: #{tpu_custom_call.1} parent=23 // pred_region
          %s169 = ssub.s32 128, 128
          %170 = vsyncadd %s161, %s169
          %s171 = sadd.s32 %s23, %s22
          %s172 = smul.addr %s171, 128
          %s173 = scalar_lea.hbm %s1, %s172
          %s175 = sshll.u32 %s164, 4
          %s176 = int_to_ptr.vmem [resolvable:$true] %s175
          %178 = dma.vmem_to_hbm [thread:$0]  %s176, 128, %s173, %s161
        $region32: #{tpu_custom_call.1} parent=23 // pred_fallthru
          _
      $region24: #{tpu_custom_call.1} parent=5 // pred_fallthru
        _
      %p179 = scmp.le.s32.totalorder 2, %s13
      // Predicated region
      $region33: #{tpu_custom_call.1} parent=5 // pred_check
        %p180 = pneg %p179
      $region34: #{tpu_custom_call.1} parent=5 // pred_check_branch
        %182 = sbr.rel (%p180) target = $region36
      $region35: #{tpu_custom_call.1} parent=5 // pred_region
        %s183 = ssub.s32 %s13, 2
        // Predicated region
        $region37: #{tpu_custom_call.1} parent=35 // pred_check
          %p184 = pneg %p82
        $region38: #{tpu_custom_call.1} parent=35 // pred_check_branch
          %186 = sbr.rel (%p184) target = $region40
        $region39: #{tpu_custom_call.1} parent=35 // pred_region
          %s187 = sand.u32 %s67, 1
          %s188 = scalar_lea.sflag [#allocation4], %s187
          %s189 = sand.u32 %s67, 1
          %s190 = smul.addr %s189, 8
          %s191 = scalar_lea.vmem [#allocation5], %s190
          %192 = dma.done %s188, 128
        $region40: #{tpu_custom_call.1} parent=35 // pred_fallthru
          _
      $region36: #{tpu_custom_call.1} parent=5 // pred_fallthru
        _
    $region6: #{tpu_custom_call.1} parent=1 // loop_footer
      %s17 = sadd.s32 1, %s13
    $region7: #{tpu_custom_call.1} parent=1 // loop_footer_branch
      %12 = sbr.rel target = $region3
    $region8: #{tpu_custom_call.1} parent=1 // loop_exit
      _
    %193 = vsyncpa [#allocation3], 1
    %s194 = scalar_lea.sflag [#allocation3], 1
    %195 = vsyncpa %s194, 1
    %196 = vsyncpa [#allocation4], 1
    %s197 = scalar_lea.sflag [#allocation4], 1
    %198 = vsyncpa %s197, 1

</llo_original>
